<compile_context>
chip_gen: v7x
topology: tpu7x:2x2x1
jax: 0.10.0
libtpu: 0.0.40
codegen_flags: <defaults>
</compile_context>

<pallas_src>
import jax
import jax.numpy as jnp
from jax.experimental import pallas as pl
from jax.experimental.pallas import tpu as pltpu


def _layer_scale_kernel(x_ref, gamma_ref, o_ref):
    # x_ref:     (tile_rows, Df) tile of the (row-folded) input
    # gamma_ref: (1, Df) — broadcast across the sublane (row) axis by the VPU
    o_ref[...] = x_ref[...] * gamma_ref[...]


def layer_scale(x: jax.Array, gamma: jax.Array, *, donate_input: bool = False) -> jax.Array:
    """Computes x * gamma where gamma has shape (D,) and D is x's last dim."""
    orig_shape = x.shape
    D = orig_shape[-1]
    assert gamma.shape == (D,), f"gamma shape {gamma.shape} != ({D},)"

    # Multiply in x's dtype (explicit precision decision; matches standard f32 LayerScale).
    gamma = gamma.astype(x.dtype)

    x2d = x.reshape(-1, D)  # (R, D)
    R = x2d.shape[0]

    # --- Lane-dense folding for small channel dims ------------------------------------
    # If D < 128, fold k = 128 // D consecutive rows into the lane dim so the output last
    # dim is 128-wide (avoids 75%-masked vregs / masked partial stores for D=32).
    if D < 128 and (128 % D == 0) and (R % (128 // D) == 0):
        k = 128 // D
    else:
        k = 1
    Rf = R // k
    Df = D * k
    x2d = x2d.reshape(Rf, Df)                      # contiguous reshape — layout only
    gamma_row = jnp.tile(gamma, k).reshape(1, Df)  # (1, Df), matches the folded layout

    # --- Row tiling --------------------------------------------------------------------
    itemsize = jnp.dtype(x.dtype).itemsize
    sublane = 32 // itemsize            # 8 for f32, 16 for bf16, 32 for int8/fp8
    target_block_bytes = 2 * 1024 * 1024  # ~2 MiB blocks: in+out double buffers ≈ 8 MiB VMEM

    max_rows = max(sublane, target_block_bytes // (Df * itemsize))
    if Rf <= max_rows:
        tile_rows = Rf                  # full-extent block is always a legal block shape
    else:
        tile_rows = (max_rows // sublane) * sublane  # keep sublane-packing alignment

    grid = (pl.cdiv(Rf, tile_rows),)

    out = pl.pallas_call(
        _layer_scale_kernel,
        out_shape=jax.ShapeDtypeStruct((Rf, Df), x.dtype),
        grid_spec=pltpu.PrefetchScalarGridSpec(
            num_scalar_prefetch=0,
            grid=grid,
            in_specs=[
                pl.BlockSpec((tile_rows, Df), lambda i: (i, 0)),
                # Constant block index -> gamma stays resident, no per-step re-DMA.
                pl.BlockSpec((1, Df), lambda i: (0, 0)),
            ],
            out_specs=pl.BlockSpec((tile_rows, Df), lambda i: (i, 0)),
        ),
        compiler_params=pltpu.CompilerParams(
            dimension_semantics=("parallel",),
        ),
        input_output_aliases=({0: 0} if donate_input else {}),
    )(x2d, gamma_row)

    return out.reshape(orig_shape)


if __name__ == "__main__":
    key = jax.random.PRNGKey(0)

    # Shapes consistent with a transformer LayerScale: (batch, seq, hidden)
    B, N, D = 2, 8, 32
    init_values = 1e-05

    x = jax.random.normal(key, (B, N, D), dtype=jnp.float32)
    # Deterministic parameter init, matching nn.Parameter(init_values * torch.ones(dim))
    gamma = init_values * jnp.ones((D,), dtype=jnp.float32)

    y = layer_scale(x, gamma)
    y = jax.block_until_ready(y)

    # Reference check (plain JAX broadcast multiply)
    y_ref = x * gamma
    assert y.shape == x.shape
    assert jnp.allclose(y, y_ref, atol=1e-6, rtol=1e-6)

    print("KERNEL_OK")
</pallas_src>

<mosaic_0001>
module attributes {stable_mosaic.version = 11 : i64} {
  func.func @_layer_scale_kernel(%arg0: i32, %arg1: memref<4x128xf32, #tpu.memory_space<vmem>>, %arg2: memref<1x128xf32, #tpu.memory_space<vmem>>, %arg3: memref<4x128xf32, #tpu.memory_space<vmem>>) attributes {dimension_semantics = [#tpu.dimension_semantics<parallel>], iteration_bounds = array<i64: 1>, scalar_prefetch = 0 : i64, scratch_operands = 0 : i64, tpu.core_type = #tpu.core_type<tc>, window_params = [{transform_indices = @transform_0, window_bounds = array<i64: 4, 128>}, {pipeline_mode = #tpu.pipeline_mode<synchronous>, transform_indices = @transform_1, window_bounds = array<i64: 1, 128>}, {transform_indices = @transform_2, window_bounds = array<i64: 4, 128>}]} {
    %c0 = arith.constant 0 : index
    %c0_0 = arith.constant 0 : index
    %0 = vector.load %arg1[%c0, %c0_0] : memref<4x128xf32, #tpu.memory_space<vmem>>, vector<4x128xf32>
    %c0_1 = arith.constant 0 : index
    %c0_2 = arith.constant 0 : index
    %1 = vector.load %arg2[%c0_1, %c0_2] : memref<1x128xf32, #tpu.memory_space<vmem>>, vector<1x128xf32>
    %2 = vector.broadcast %1 : vector<1x128xf32> to vector<4x128xf32>
    %3 = arith.mulf %0, %2 : vector<4x128xf32>
    %c0_3 = arith.constant 0 : index
    %c0_4 = arith.constant 0 : index
    %4 = vector.load %arg3[%c0_3, %c0_4] : memref<4x128xf32, #tpu.memory_space<vmem>>, vector<4x128xf32>
    tpu.vector_store %arg3[%c0_3, %c0_4], %3 {strides = array<i32>} : memref<4x128xf32, #tpu.memory_space<vmem>>, vector<4x128xf32>,
    return
  }
  func.func @transform_0(%arg0: i32) -> (i32, i32) {
    %c0_i32 = arith.constant 0 : i32
    %c0_i32_0 = arith.constant 0 : i32
    return %arg0, %c0_i32 : i32, i32
  }
  func.func @transform_1(%arg0: i32) -> (i32, i32) {
    %c0_i32 = arith.constant 0 : i32
    %c0_i32_0 = arith.constant 0 : i32
    %c0_i32_1 = arith.constant 0 : i32
    return %c0_i32, %c0_i32_0 : i32, i32
  }
  func.func @transform_2(%arg0: i32) -> (i32, i32) {
    %c0_i32 = arith.constant 0 : i32
    %c0_i32_0 = arith.constant 0 : i32
    return %arg0, %c0_i32 : i32, i32
  }
}

</mosaic_0001>

<llo_original>
// kernel: tpu_custom_call.1
$region0: #{tpu_custom_call.1}
  #allocation0 [shape = 'u32[]', space=smem, size = 0x4, offset = 0x4, fixed_abs, tag = 'smem constant byte address 0x4 - core index']
  #allocation1 [shape = 'u32[144,128]{1,0:T(1,128)}', space=vmem, size = 0x12000, scoped, tag = 'internal scratch']
  %s0 = inlined_call_operand.hbm [shape: f32[4,128], index: 0, kind: input, shape index: {}]
  %s1 = inlined_call_operand.vmem [shape: f32[1,128], index: 1, kind: input, shape index: {}]
  %s2 = inlined_call_operand.hbm [shape: f32[4,128], index: 2, kind: output, shape index: {}]
  %s3 = sld [smem:[#allocation0]]
  $region22: #{tpu_custom_call.1} parent=0
    _
  %s5 = ssub.s32 1, %s3
  %s6 = scalar_select 0, %s5, %s3
  $region1: #{tpu_custom_call.1} parent=0
    #allocation2 [shape = 'u8[2048]{0}', space=vmem, size = 0x800, scoped, tag = 'input window, operand 0, single buffered']
    #allocation3 [shape = 's32[1]{0}', space=sflag, size = 0x4, scoped, tag = 'scoped memory for tpu_custom_call.1']
    #allocation4 [shape = 's32[1]{0}', space=sflag, size = 0x4, scoped, tag = 'scoped memory for tpu_custom_call.1']
    #allocation5 [shape = 'u8[2048]{0}', space=vmem, size = 0x800, scoped, tag = 'output window, operand 0, single buffered']
    %7 = vsyncpa [#allocation3], 0
    %8 = vsyncpa [#allocation4], 0
    // Predicated region
    $region2: #{tpu_custom_call.1} parent=1 // pred_check
      _
    $region3: #{tpu_custom_call.1} parent=1 // pred_check_branch
      %10 = sbr.rel (0) target = $region5
    $region4: #{tpu_custom_call.1} parent=1 // pred_region
      %s12 = ssub.s32 64, 64
      %13 = vsyncadd [#allocation3], %s12
      %s15 = sshll.u32 [#allocation2], 4
      %s16 = int_to_ptr.vmem [resolvable:$true] %s15
      %18 = dma.hbm_to_vmem [thread:$0]  %s0, 64, %s16, [#allocation3]
    $region5: #{tpu_custom_call.1} parent=1 // pred_fallthru
      _
    // Predicated region
    $region6: #{tpu_custom_call.1} parent=1 // pred_check
      _
    $region7: #{tpu_custom_call.1} parent=1 // pred_check_branch
      %20 = sbr.rel (0) target = $region9
    $region8: #{tpu_custom_call.1} parent=1 // pred_region
      _
    $region9: #{tpu_custom_call.1} parent=1 // pred_fallthru
      _
    // Predicated region
    $region10: #{tpu_custom_call.1} parent=1 // pred_check
      _
    $region11: #{tpu_custom_call.1} parent=1 // pred_check_branch
      %22 = sbr.rel (0) target = $region13
    $region12: #{tpu_custom_call.1} parent=1 // pred_region
      %23 = dma.done [#allocation3], 64
    $region13: #{tpu_custom_call.1} parent=1 // pred_fallthru
      _
    %v24 = vld [vmem:[#allocation2] sm:$0xf]
    %v25 = vld [vmem:[%s1] sm:$0x1]
    %v27 = vlaneseq
    %v28 = vshrl.u32 %v27, 7
    %v29 = vsub.s32 0, %v28
    %v30 = vrot.slane %v25, %v29
    %v32 = vmul.f32 %v24, %v30
    %33 = vst [vmem:[#allocation5] sm:$0xf] %v32
    // Predicated region
    $region14: #{tpu_custom_call.1} parent=1 // pred_check
      _
    $region15: #{tpu_custom_call.1} parent=1 // pred_check_branch
      %35 = sbr.rel (0) target = $region17
    $region16: #{tpu_custom_call.1} parent=1 // pred_region
      %s37 = ssub.s32 64, 64
      %38 = vsyncadd [#allocation4], %s37
      %s40 = sshll.u32 [#allocation5], 4
      %s41 = int_to_ptr.vmem [resolvable:$true] %s40
      %43 = dma.vmem_to_hbm [thread:$0]  %s41, 64, %s2, [#allocation4]
    $region17: #{tpu_custom_call.1} parent=1 // pred_fallthru
      _
    // Predicated region
    $region18: #{tpu_custom_call.1} parent=1 // pred_check
      _
    $region19: #{tpu_custom_call.1} parent=1 // pred_check_branch
      %45 = sbr.rel (0) target = $region21
    $region20: #{tpu_custom_call.1} parent=1 // pred_region
      %46 = dma.done [#allocation4], 64
    $region21: #{tpu_custom_call.1} parent=1 // pred_fallthru
      _
    %47 = vsyncpa [#allocation3], 1
    %48 = vsyncpa [#allocation4], 1

</llo_original>
